<compile_context>
chip_gen: v7x
topology: tpu7x:2x2x1
jax: 0.10.0
libtpu: 0.0.40
codegen_flags: <defaults>
</compile_context>

<pallas_src>
import functools

import jax
import jax.numpy as jnp
from jax.experimental import pallas as pl
from jax.experimental.pallas import tpu as pltpu


def residual_block_kernel(x_ref, w1_ref, w2_ref, o_ref, *, seq_len):
    # x_ref : (C, B)   activations, B = batch_block * seq_len (batch in lanes)
    # w1_ref: (C, 3C)  conv1 weights, im2col layout (tap-major column blocks)
    # w2_ref: (C, 3C)  conv2 weights
    # o_ref : (C, B)   output in the same lane-dense layout
    C, B = x_ref.shape
    x = x_ref[...]

    # Lane position within its own sequence.  Shifted taps must not leak across
    # the per-sequence boundaries folded into the lane axis; zeroing those
    # columns also implements Conv1d's padding=1 zero boundary.
    pos = jax.lax.broadcasted_iota(jnp.int32, (C, B), 1) % seq_len
    has_left = pos != 0                 # column l has a valid l-1 neighbor
    has_right = pos != seq_len - 1      # column l has a valid l+1 neighbor

    def conv3(h, w_ref):
        # Build the l-1 / l+1 operands with lane rotations (XLU slot, cheap)
        # and fold the 3 taps into a single MXU matmul (contraction dim = 3C).
        h_left = jnp.where(has_left, pltpu.roll(h, shift=1, axis=1), 0.0)
        h_right = jnp.where(has_right, pltpu.roll(h, shift=B - 1, axis=1), 0.0)
        stacked = jnp.concatenate([h_left, h, h_right], axis=0)     # (3C, B)
        return jnp.dot(w_ref[...], stacked.astype(w_ref.dtype),
                       preferred_element_type=jnp.float32)

    h = jnp.maximum(conv3(x, w1_ref), 0.0)                  # conv1 -> relu1
    out = jnp.maximum(conv3(h, w2_ref), 0.0)                # conv2 -> relu2
    out = jnp.maximum(out + x.astype(jnp.float32), 0.0)     # + identity -> relu
    o_ref[...] = out.astype(o_ref.dtype)


def residual_block(x, w1, w2, *, batch_block=None, use_bf16_matmul=False):
    """x: (N, C, L) f32; w1, w2: (C_out, C_in, 3) f32 (PyTorch Conv1d layout)."""
    N, C, L = x.shape

    # Lane-dense layout: fold (N, L) into one lane axis -> (C, N*L).
    x2d = jnp.transpose(x, (1, 0, 2)).reshape(C, N * L)

    # im2col weight layout: (C_out, C_in, 3) -> (C_out, 3*C_in), tap-major so
    # column block k multiplies the tap-k shifted operand.
    w1f = jnp.transpose(w1, (0, 2, 1)).reshape(C, 3 * C)
    w2f = jnp.transpose(w2, (0, 2, 1)).reshape(C, 3 * C)
    if use_bf16_matmul:
        # v6e/v7x: bf16 MXU inputs with f32 accumulation; epilogue stays f32.
        # (Off by default to keep bit-level parity with the f32 reference.)
        w1f = w1f.astype(jnp.bfloat16)
        w2f = w2f.astype(jnp.bfloat16)

    # Whole batch in a single grid step by default (amortizes ~0.35us/step of
    # pipeline overhead); chunk only when the block would get large, keeping
    # the chunk's lane width a multiple of 128.
    if batch_block is None:
        batch_block = N
        if C * N * L * 4 > (8 << 20):
            for cand in range(N - 1, 0, -1):
                if (N % cand == 0 and (cand * L) % 128 == 0
                        and C * cand * L * 4 <= (8 << 20)):
                    batch_block = cand
                    break
    assert N % batch_block == 0
    B = batch_block * L

    out2d = pl.pallas_call(
        functools.partial(residual_block_kernel, seq_len=L),
        out_shape=jax.ShapeDtypeStruct((C, N * L), x.dtype),
        grid_spec=pltpu.PrefetchScalarGridSpec(
            num_scalar_prefetch=0,
            grid=(N // batch_block,),
            in_specs=[
                pl.BlockSpec((C, B), lambda n: (0, n)),
                pl.BlockSpec((C, 3 * C), lambda n: (0, 0)),
                pl.BlockSpec((C, 3 * C), lambda n: (0, 0)),
            ],
            out_specs=pl.BlockSpec((C, B), lambda n: (0, n)),
        ),
        compiler_params=pltpu.CompilerParams(
            dimension_semantics=("parallel",)),
    )(x2d, w1f, w2f)

    # Back to PyTorch's (N, C, L) layout.
    return out2d.reshape(C, N, L).transpose(1, 0, 2)


def residual_block_ref(x, w1, w2):
    """Pure-JAX reference matching the PyTorch module."""
    dn = ("NCH", "OIH", "NCH")

    def conv(a, w):
        return jax.lax.conv_general_dilated(
            a, w, window_strides=(1,), padding=((1, 1),),
            dimension_numbers=dn)

    out = jnp.maximum(conv(x, w1), 0.0)
    out = jnp.maximum(conv(out, w2), 0.0)
    out = jnp.maximum(out + x, 0.0)
    return out


if __name__ == "__main__":
    N, C, L = 2, 4, 16

    key = jax.random.PRNGKey(0)
    kx, k1, k2 = jax.random.split(key, 3)

    x = jax.random.normal(kx, (N, C, L), dtype=jnp.float32)
    # Deterministic Kaiming-like init for the two Conv1d weights (bias=False).
    std = (2.0 / (C * 3)) ** 0.5
    w1 = std * jax.random.normal(k1, (C, C, 3), dtype=jnp.float32)
    w2 = std * jax.random.normal(k2, (C, C, 3), dtype=jnp.float32)

    out = residual_block(x, w1, w2)
    out = jax.block_until_ready(out)

    ref = residual_block_ref(x, w1, w2)
    assert out.shape == (N, C, L)
    assert jnp.allclose(out, ref, atol=1e-5, rtol=1e-5), "mismatch vs reference"

    print("KERNEL_OK")
</pallas_src>

<mosaic_0001>
module attributes {stable_mosaic.version = 11 : i64} {
  func.func @residual_block_kernel(%arg0: i32, %arg1: memref<4x32xf32, #tpu.memory_space<vmem>>, %arg2: memref<4x12xf32, #tpu.memory_space<vmem>>, %arg3: memref<4x12xf32, #tpu.memory_space<vmem>>, %arg4: memref<4x32xf32, #tpu.memory_space<vmem>>) attributes {dimension_semantics = [#tpu.dimension_semantics<parallel>], iteration_bounds = array<i64: 1>, scalar_prefetch = 0 : i64, scratch_operands = 0 : i64, tpu.core_type = #tpu.core_type<tc>, window_params = [{transform_indices = @transform_0, window_bounds = array<i64: 4, 32>}, {pipeline_mode = #tpu.pipeline_mode<synchronous>, transform_indices = @transform_1, window_bounds = array<i64: 4, 12>}, {pipeline_mode = #tpu.pipeline_mode<synchronous>, transform_indices = @transform_2, window_bounds = array<i64: 4, 12>}, {transform_indices = @transform_3, window_bounds = array<i64: 4, 32>}]} {
    %c0 = arith.constant 0 : index
    %c0_0 = arith.constant 0 : index
    %0 = vector.load %arg1[%c0, %c0_0] : memref<4x32xf32, #tpu.memory_space<vmem>>, vector<4x32xf32>
    %1 = tpu.iota {dimensions = array<i32: 1>} : vector<4x32xi32>
    %c16_i32 = arith.constant 16 : i32
    %c0_i32 = arith.constant 0 : i32
    %2 = arith.cmpi eq, %c16_i32, %c0_i32 : i32
    %c1_i32 = arith.constant 1 : i32
    %3 = arith.select %2, %c1_i32, %c16_i32 : i32
    %4 = vector.broadcast %3 : i32 to vector<4x32xi32>
    %5 = arith.remsi %1, %4 : vector<4x32xi32>
    %c0_i32_1 = arith.constant 0 : i32
    %6 = vector.broadcast %c0_i32_1 : i32 to vector<4x32xi32>
    %7 = arith.cmpi ne, %5, %6 : vector<4x32xi32>
    %c0_i32_2 = arith.constant 0 : i32
    %8 = vector.broadcast %c0_i32_2 : i32 to vector<4x32xi32>
    %9 = arith.cmpi slt, %5, %8 : vector<4x32xi32>
    %c0_i32_3 = arith.constant 0 : i32
    %10 = arith.cmpi slt, %3, %c0_i32_3 : i32
    %11 = vector.broadcast %10 : i1 to vector<4x32xi1>
    %12 = vector.broadcast %11 : vector<4x32xi1> to vector<4x32xi1>
    %13 = arith.xori %9, %12 : vector<4x32xi1>
    %14 = arith.andi %13, %7 : vector<4x32xi1>
    %15 = vector.broadcast %3 : i32 to vector<4x32xi32>
    %16 = arith.addi %5, %15 : vector<4x32xi32>
    %17 = arith.select %14, %16, %5 : vector<4x32xi1>, vector<4x32xi32>
    %c0_i32_4 = arith.constant 0 : i32
    %18 = vector.broadcast %c0_i32_4 : i32 to vector<4x32xi32>
    %19 = arith.cmpi ne, %17, %18 : vector<4x32xi32>
    %c15_i32 = arith.constant 15 : i32
    %20 = vector.broadcast %c15_i32 : i32 to vector<4x32xi32>
    %21 = arith.cmpi ne, %17, %20 : vector<4x32xi32>
    %c1_i32_5 = arith.constant 1 : i32
    %22 = tpu.dynamic_rotate %0 by %c1_i32_5 dim 1 : vector<4x32xf32>, i32 -> vector<4x32xf32>
    %cst = arith.constant 0.000000e+00 : f32
    %23 = vector.broadcast %cst : f32 to vector<4x32xf32>
    %24 = arith.select %19, %22, %23 : vector<4x32xi1>, vector<4x32xf32>
    %c31_i32 = arith.constant 31 : i32
    %25 = tpu.dynamic_rotate %0 by %c31_i32 dim 1 : vector<4x32xf32>, i32 -> vector<4x32xf32>
    %cst_6 = arith.constant 0.000000e+00 : f32
    %26 = vector.broadcast %cst_6 : f32 to vector<4x32xf32>
    %27 = arith.select %21, %25, %26 : vector<4x32xi1>, vector<4x32xf32>
    %28 = tpu.concatenate %24, %0, %27 in 0 : vector<4x32xf32>, vector<4x32xf32>, vector<4x32xf32> -> vector<12x32xf32>
    %c0_7 = arith.constant 0 : index
    %c0_8 = arith.constant 0 : index
    %29 = vector.load %arg2[%c0_7, %c0_8] : memref<4x12xf32, #tpu.memory_space<vmem>>, vector<4x12xf32>
    %cst_9 = arith.constant dense<0.000000e+00> : vector<4x32xf32>
    %30 = tpu.matmul %29, %28, %cst_9 {dimension_numbers = #tpu.dot_dimension_numbers<[1], [0], [0], [1], [0, 0, 1, 1], [], []>} : vector<4x12xf32>, vector<12x32xf32>, vector<4x32xf32> -> vector<4x32xf32>
    %cst_10 = arith.constant 0.000000e+00 : f32
    %31 = vector.broadcast %cst_10 : f32 to vector<4x32xf32>
    %32 = arith.maximumf %30, %31 : vector<4x32xf32>
    %c1_i32_11 = arith.constant 1 : i32
    %33 = tpu.dynamic_rotate %32 by %c1_i32_11 dim 1 : vector<4x32xf32>, i32 -> vector<4x32xf32>
    %cst_12 = arith.constant 0.000000e+00 : f32
    %34 = vector.broadcast %cst_12 : f32 to vector<4x32xf32>
    %35 = arith.select %19, %33, %34 : vector<4x32xi1>, vector<4x32xf32>
    %c31_i32_13 = arith.constant 31 : i32
    %36 = tpu.dynamic_rotate %32 by %c31_i32_13 dim 1 : vector<4x32xf32>, i32 -> vector<4x32xf32>
    %cst_14 = arith.constant 0.000000e+00 : f32
    %37 = vector.broadcast %cst_14 : f32 to vector<4x32xf32>
    %38 = arith.select %21, %36, %37 : vector<4x32xi1>, vector<4x32xf32>
    %39 = tpu.concatenate %35, %32, %38 in 0 : vector<4x32xf32>, vector<4x32xf32>, vector<4x32xf32> -> vector<12x32xf32>
    %c0_15 = arith.constant 0 : index
    %c0_16 = arith.constant 0 : index
    %40 = vector.load %arg3[%c0_15, %c0_16] : memref<4x12xf32, #tpu.memory_space<vmem>>, vector<4x12xf32>
    %cst_17 = arith.constant dense<0.000000e+00> : vector<4x32xf32>
    %41 = tpu.matmul %40, %39, %cst_17 {dimension_numbers = #tpu.dot_dimension_numbers<[1], [0], [0], [1], [0, 0, 1, 1], [], []>} : vector<4x12xf32>, vector<12x32xf32>, vector<4x32xf32> -> vector<4x32xf32>
    %cst_18 = arith.constant 0.000000e+00 : f32
    %42 = vector.broadcast %cst_18 : f32 to vector<4x32xf32>
    %43 = arith.maximumf %41, %42 : vector<4x32xf32>
    %44 = arith.addf %43, %0 : vector<4x32xf32>
    %cst_19 = arith.constant 0.000000e+00 : f32
    %45 = vector.broadcast %cst_19 : f32 to vector<4x32xf32>
    %46 = arith.maximumf %44, %45 : vector<4x32xf32>
    %c0_20 = arith.constant 0 : index
    %c0_21 = arith.constant 0 : index
    %47 = vector.load %arg4[%c0_20, %c0_21] : memref<4x32xf32, #tpu.memory_space<vmem>>, vector<4x32xf32>
    tpu.vector_store %arg4[%c0_20, %c0_21], %46 {strides = array<i32>} : memref<4x32xf32, #tpu.memory_space<vmem>>, vector<4x32xf32>,
    return
  }
  func.func @transform_0(%arg0: i32) -> (i32, i32) {
    %c0_i32 = arith.constant 0 : i32
    %c0_i32_0 = arith.constant 0 : i32
    return %c0_i32, %arg0 : i32, i32
  }
  func.func @transform_1(%arg0: i32) -> (i32, i32) {
    %c0_i32 = arith.constant 0 : i32
    %c0_i32_0 = arith.constant 0 : i32
    %c0_i32_1 = arith.constant 0 : i32
    return %c0_i32, %c0_i32_0 : i32, i32
  }
  func.func @transform_2(%arg0: i32) -> (i32, i32) {
    %c0_i32 = arith.constant 0 : i32
    %c0_i32_0 = arith.constant 0 : i32
    %c0_i32_1 = arith.constant 0 : i32
    return %c0_i32, %c0_i32_0 : i32, i32
  }
  func.func @transform_3(%arg0: i32) -> (i32, i32) {
    %c0_i32 = arith.constant 0 : i32
    %c0_i32_0 = arith.constant 0 : i32
    return %c0_i32, %arg0 : i32, i32
  }
}

</mosaic_0001>

<llo_original>
// kernel: tpu_custom_call.1
$region0: #{tpu_custom_call.1}
  #allocation0 [shape = 'u32[]', space=smem, size = 0x4, offset = 0x4, fixed_abs, tag = 'smem constant byte address 0x4 - core index']
  #allocation1 [shape = 'u32[144,128]{1,0:T(1,128)}', space=vmem, size = 0x12000, scoped, tag = 'internal scratch']
  %s0 = inlined_call_operand.hbm [shape: f32[4,32], index: 0, kind: input, shape index: {}]
  %s1 = inlined_call_operand.hbm [shape: f32[4,12], index: 1, kind: input, shape index: {}]
  %s2 = inlined_call_operand.vmem [shape: f32[4,12], index: 2, kind: input, shape index: {}]
  %s3 = inlined_call_operand.hbm [shape: f32[4,32], index: 3, kind: output, shape index: {}]
  %s4 = sld [smem:[#allocation0]]
  $region30: #{tpu_custom_call.1} parent=0
    _
  %s6 = ssub.s32 1, %s4
  %s7 = scalar_select 0, %s6, %s4
  $region1: #{tpu_custom_call.1} parent=0
    #allocation2 [shape = 'u8[2048]{0}', space=vmem, size = 0x800, scoped, tag = 'input window, operand 0, single buffered']
    #allocation3 [shape = 's32[1]{0}', space=sflag, size = 0x4, scoped, tag = 'scoped memory for tpu_custom_call.1']
    #allocation4 [shape = 's32[1]{0}', space=sflag, size = 0x4, scoped, tag = 'scoped memory for tpu_custom_call.1']
    #allocation5 [shape = 'u8[2048]{0}', space=vmem, size = 0x800, scoped, tag = 'input window, operand 1, single buffered']
    #allocation6 [shape = 's32[1]{0}', space=sflag, size = 0x4, scoped, tag = 'scoped memory for tpu_custom_call.1']
    #allocation7 [shape = 'u8[2048]{0}', space=vmem, size = 0x800, scoped, tag = 'output window, operand 0, single buffered']
    %8 = vsyncpa [#allocation3], 0
    %9 = vsyncpa [#allocation6], 0
    %10 = vsyncpa [#allocation4], 0
    // Predicated region
    $region2: #{tpu_custom_call.1} parent=1 // pred_check
      _
    $region3: #{tpu_custom_call.1} parent=1 // pred_check_branch
      %12 = sbr.rel (0) target = $region5
    $region4: #{tpu_custom_call.1} parent=1 // pred_region
      %s14 = ssub.s32 64, 64
      %15 = vsyncadd [#allocation3], %s14
      %s17 = sshll.u32 [#allocation2], 4
      %s18 = int_to_ptr.vmem [resolvable:$true] %s17
      %20 = dma.hbm_to_vmem [thread:$0]  %s0, 64, %s18, [#allocation3]
    $region5: #{tpu_custom_call.1} parent=1 // pred_fallthru
      _
    // Predicated region
    $region6: #{tpu_custom_call.1} parent=1 // pred_check
      _
    $region7: #{tpu_custom_call.1} parent=1 // pred_check_branch
      %22 = sbr.rel (0) target = $region9
    $region8: #{tpu_custom_call.1} parent=1 // pred_region
      %s24 = ssub.s32 64, 64
      %25 = vsyncadd [#allocation6], %s24
      %s27 = sshll.u32 [#allocation5], 4
      %s28 = int_to_ptr.vmem [resolvable:$true] %s27
      %30 = dma.hbm_to_vmem [thread:$0]  %s1, 64, %s28, [#allocation6]
    $region9: #{tpu_custom_call.1} parent=1 // pred_fallthru
      _
    // Predicated region
    $region10: #{tpu_custom_call.1} parent=1 // pred_check
      _
    $region11: #{tpu_custom_call.1} parent=1 // pred_check_branch
      %32 = sbr.rel (0) target = $region13
    $region12: #{tpu_custom_call.1} parent=1 // pred_region
      _
    $region13: #{tpu_custom_call.1} parent=1 // pred_fallthru
      _
    // Predicated region
    $region14: #{tpu_custom_call.1} parent=1 // pred_check
      _
    $region15: #{tpu_custom_call.1} parent=1 // pred_check_branch
      %34 = sbr.rel (0) target = $region17
    $region16: #{tpu_custom_call.1} parent=1 // pred_region
      %35 = dma.done [#allocation3], 64
    $region17: #{tpu_custom_call.1} parent=1 // pred_fallthru
      _
    // Predicated region
    $region18: #{tpu_custom_call.1} parent=1 // pred_check
      _
    $region19: #{tpu_custom_call.1} parent=1 // pred_check_branch
      %37 = sbr.rel (0) target = $region21
    $region20: #{tpu_custom_call.1} parent=1 // pred_region
      %38 = dma.done [#allocation6], 64
    $region21: #{tpu_custom_call.1} parent=1 // pred_fallthru
      _
    %v39 = vld [vmem:[#allocation2] sm:$0xf]
    %v40 = vlaneseq
    %v41 = vand.u32 %v40, 127
    %vm42 = vcmp.lt.s32.totalorder %v41, 0
    %v43 = vsub.s32 0, %v41
    %v44 = vsel %vm42, %v43, %v41
    %v45 = vshrl.u32 %v44, 4
    %v46 = vand.u32 %v44, 15
    %v47 = vsub.s32 0, %v46
    %v48 = vsel %vm42, %v47, %v46
    %vm49 = vcmp.ne.s32.totalorder %v48, 0
    %vm50 = vcmp.lt.s32.totalorder %v48, 0
    %vm51 = vmand %vm50, %vm49
    %v52 = vadd.s32 %v48, 16
    %v53 = vsel %vm51, %v52, %v48
    %vm54 = vcmp.ne.s32.totalorder %v53, 0
    %vm55 = vcmp.ne.s32.totalorder %v53, 15
    %vm56 = vcmask 1047808
    %57 = vrot.lane.b32.xlu0 %v39, 32
    %v58 = vpop.permute.xlu0 %57
    %v59 = vsel %vm56, %v58, %v39
    %60 = vrot.lane.b32.xlu0 %v59, 32
    %v61 = vpop.permute.xlu0 %60
    %v62 = vsel %vm56, %v61, %v39
    %64 = vrot.lane.b32.xlu0 %v62, 97
    %v65 = vpop.permute.xlu0 %64
    %v67 = vsel %vm54, %v65, 0.0
    %68 = vrot.lane.b32.xlu0 %v62, 127
    %v69 = vpop.permute.xlu0 %68
    %v71 = vsel %vm55, %v69, 0.0
    %v73 = vrot.slane %v39, 4
    %vm75 = vcmask 1043456
    %v76 = vsel %vm75, %v67, %v73
    %v77 = vld [vmem:[#allocation5] sm:$0xf]
    %vm78 = vcmask 97280
    %v80 = vsel %vm78, %v77, 0
    %v83 = vsel %vm75, %v71, 0
    %85 = vmatprep.subr.mxu0 0.0
    %86 = vmatpush1.msra.mxu0 %v76
    %87 = vmatprep.subr.mxu0 0.0
    %88 = vmatpush1.msra.mxu0 %v83
    %89 = vmatprep.subr.mxu0 0.0
    %90 = vmatpush1.msra.mxu0 0.0
    %91 = vmatprep.subr.mxu0 0.0
    %92 = vmatpush1.msra.mxu0 0.0
    %93 = vmatprep.subr.mxu0 0.0
    %94 = vmatpush1.msra.mxu0 0.0
    %95 = vmatprep.subr.mxu0 0.0
    %96 = vmatpush1.msra.mxu0 0.0
    %97 = vmatprep.subr.mxu0 0.0
    %98 = vmatpush1.msra.mxu0 0.0
    %99 = vmatprep.subr.mxu0 0.0
    %100 = vmatpush1.msra.mxu0 0.0
    %101 = vmatprep.subr.mxu0 0.0
    %102 = vmatpush1.msra.mxu0 0.0
    %103 = vmatprep.subr.mxu0 0.0
    %104 = vmatpush1.msra.mxu0 0.0
    %105 = vmatprep.subr.mxu0 0.0
    %106 = vmatpush1.msra.mxu0 0.0
    %107 = vmatprep.subr.mxu0 0.0
    %108 = vmatpush1.msra.mxu0 0.0
    %109 = vmatprep.subr.mxu0 0.0
    %110 = vmatpush1.msra.mxu0 0.0
    %111 = vmatprep.subr.mxu0 0.0
    %112 = vmatpush1.msra.mxu0 0.0
    %113 = vmatprep.subr.mxu0 0.0
    %114 = vmatpush1.msra.mxu0 0.0
    %115 = vmatprep.subr.mxu0 0.0
    %116 = vmatpush1.msra.mxu0 0.0
    %117 = vmatprep.subr.mxu0 0.0
    %118 = vmatpush1.msra.mxu0 0.0
    %119 = vmatprep.subr.mxu0 0.0
    %120 = vmatpush1.msra.mxu0 0.0
    %121 = vmatprep.subr.mxu0 0.0
    %122 = vmatpush1.msra.mxu0 0.0
    %123 = vmatprep.subr.mxu0 0.0
    %124 = vmatpush1.msra.mxu0 0.0
    %125 = vmatprep.subr.mxu0 0.0
    %126 = vmatpush1.msra.mxu0 0.0
    %127 = vmatprep.subr.mxu0 0.0
    %128 = vmatpush1.msra.mxu0 0.0
    %129 = vmatprep.subr.mxu0 0.0
    %130 = vmatpush1.msra.mxu0 0.0
    %131 = vmatprep.subr.mxu0 0.0
    %132 = vmatpush1.msra.mxu0 0.0
    %133 = vmatprep.subr.mxu0 0.0
    %134 = vmatpush1.msra.mxu0 0.0
    %135 = vmatprep.subr.mxu0 0.0
    %136 = vmatpush1.msra.mxu0 0.0
    %137 = vmatprep.subr.mxu0 0.0
    %138 = vmatpush1.msra.mxu0 0.0
    %139 = vmatprep.subr.mxu0 0.0
    %140 = vmatpush1.msra.mxu0 0.0
    %141 = vmatprep.subr.mxu0 0.0
    %142 = vmatpush1.msra.mxu0 0.0
    %143 = vmatprep.subr.mxu0 0.0
    %144 = vmatpush1.msra.mxu0 0.0
    %145 = vmatprep.subr.mxu0 0.0
    %146 = vmatpush1.msra.mxu0 0.0
    %147 = vmatprep.subr.mxu0 0.0
    %148 = vmatpush1.msra.mxu0 0.0
    %149 = vmatprep.mubr.f32.mxu0 0.0
    %150 = vmatmul.mubr.f32.gmra.mrb[0].mxu0 %v80
    %v151 = vpop.f32.mrb[0].mxu0
    %v152 = vadd.f32 0.0, %v151
    %v153 = vpop.f32.mrb[0].mxu0
    %154 = vdwg.mxu0
    %v155 = vmax.f32 %v152, 0.0
    %156 = vrot.lane.b32.xlu0 %v155, 32
    %v157 = vpop.permute.xlu0 %156
    %v158 = vsel %vm56, %v157, %v155
    %159 = vrot.lane.b32.xlu0 %v158, 32
    %v160 = vpop.permute.xlu0 %159
    %v161 = vsel %vm56, %v160, %v155
    %163 = vrot.lane.b32.xlu0 %v161, 97
    %v164 = vpop.permute.xlu0 %163
    %v166 = vsel %vm54, %v164, 0.0
    %167 = vrot.lane.b32.xlu0 %v161, 127
    %v168 = vpop.permute.xlu0 %167
    %v170 = vsel %vm55, %v168, 0.0
    %v172 = vrot.slane %v155, 4
    %v174 = vsel %vm75, %v166, %v172
    %v175 = vld [vmem:[%s2] sm:$0xf]
    %v177 = vsel %vm78, %v175, 0
    %v180 = vsel %vm75, %v170, 0
    %182 = vmatprep.subr.mxu0 0.0
    %183 = vmatpush1.msra.mxu0 %v174
    %184 = vmatprep.subr.mxu0 0.0
    %185 = vmatpush1.msra.mxu0 %v180
    %186 = vmatprep.subr.mxu0 0.0
    %187 = vmatpush1.msra.mxu0 0.0
    %188 = vmatprep.subr.mxu0 0.0
    %189 = vmatpush1.msra.mxu0 0.0
    %190 = vmatprep.subr.mxu0 0.0
    %191 = vmatpush1.msra.mxu0 0.0
    %192 = vmatprep.subr.mxu0 0.0
    %193 = vmatpush1.msra.mxu0 0.0
    %194 = vmatprep.subr.mxu0 0.0
    %195 = vmatpush1.msra.mxu0 0.0
    %196 = vmatprep.subr.mxu0 0.0
    %197 = vmatpush1.msra.mxu0 0.0
    %198 = vmatprep.subr.mxu0 0.0
    %199 = vmatpush1.msra.mxu0 0.0
    %200 = vmatprep.subr.mxu0 0.0
    %201 = vmatpush1.msra.mxu0 0.0
    %202 = vmatprep.subr.mxu0 0.0
    %203 = vmatpush1.msra.mxu0 0.0
    %204 = vmatprep.subr.mxu0 0.0
    %205 = vmatpush1.msra.mxu0 0.0
    %206 = vmatprep.subr.mxu0 0.0
    %207 = vmatpush1.msra.mxu0 0.0
    %208 = vmatprep.subr.mxu0 0.0
    %209 = vmatpush1.msra.mxu0 0.0
    %210 = vmatprep.subr.mxu0 0.0
    %211 = vmatpush1.msra.mxu0 0.0
    %212 = vmatprep.subr.mxu0 0.0
    %213 = vmatpush1.msra.mxu0 0.0
    %214 = vmatprep.subr.mxu0 0.0
    %215 = vmatpush1.msra.mxu0 0.0
    %216 = vmatprep.subr.mxu0 0.0
    %217 = vmatpush1.msra.mxu0 0.0
    %218 = vmatprep.subr.mxu0 0.0
    %219 = vmatpush1.msra.mxu0 0.0
    %220 = vmatprep.subr.mxu0 0.0
    %221 = vmatpush1.msra.mxu0 0.0
    %222 = vmatprep.subr.mxu0 0.0
    %223 = vmatpush1.msra.mxu0 0.0
    %224 = vmatprep.subr.mxu0 0.0
    %225 = vmatpush1.msra.mxu0 0.0
    %226 = vmatprep.subr.mxu0 0.0
    %227 = vmatpush1.msra.mxu0 0.0
    %228 = vmatprep.subr.mxu0 0.0
    %229 = vmatpush1.msra.mxu0 0.0
    %230 = vmatprep.subr.mxu0 0.0
    %231 = vmatpush1.msra.mxu0 0.0
    %232 = vmatprep.subr.mxu0 0.0
    %233 = vmatpush1.msra.mxu0 0.0
    %234 = vmatprep.subr.mxu0 0.0
    %235 = vmatpush1.msra.mxu0 0.0
    %236 = vmatprep.subr.mxu0 0.0
    %237 = vmatpush1.msra.mxu0 0.0
    %238 = vmatprep.subr.mxu0 0.0
    %239 = vmatpush1.msra.mxu0 0.0
    %240 = vmatprep.subr.mxu0 0.0
    %241 = vmatpush1.msra.mxu0 0.0
    %242 = vmatprep.subr.mxu0 0.0
    %243 = vmatpush1.msra.mxu0 0.0
    %244 = vmatprep.subr.mxu0 0.0
    %245 = vmatpush1.msra.mxu0 0.0
    %246 = vmatprep.mubr.f32.mxu0 0.0
    %247 = vmatmul.mubr.f32.gmra.mrb[0].mxu0 %v177
    %v248 = vpop.f32.mrb[0].mxu0
    %v249 = vadd.f32 0.0, %v248
    %v250 = vpop.f32.mrb[0].mxu0
    %251 = vdwg.mxu0
    %v252 = vmax.f32 %v249, 0.0
    %v253 = vadd.f32 %v252, %v39
    %v254 = vmax.f32 %v253, 0.0
    %vm255 = vcmask 257024
    %256 = vst.msk [vmem:[#allocation7] sm:$0xf] %vm255, %v254
    // Predicated region
    $region22: #{tpu_custom_call.1} parent=1 // pred_check
      _
    $region23: #{tpu_custom_call.1} parent=1 // pred_check_branch
      %258 = sbr.rel (0) target = $region25
    $region24: #{tpu_custom_call.1} parent=1 // pred_region
      %s260 = ssub.s32 64, 64
      %261 = vsyncadd [#allocation4], %s260
      %s263 = sshll.u32 [#allocation7], 4
      %s264 = int_to_ptr.vmem [resolvable:$true] %s263
      %266 = dma.vmem_to_hbm [thread:$0]  %s264, 64, %s3, [#allocation4]
    $region25: #{tpu_custom_call.1} parent=1 // pred_fallthru
      _
    // Predicated region
    $region26: #{tpu_custom_call.1} parent=1 // pred_check
      _
    $region27: #{tpu_custom_call.1} parent=1 // pred_check_branch
      %268 = sbr.rel (0) target = $region29
    $region28: #{tpu_custom_call.1} parent=1 // pred_region
      %269 = dma.done [#allocation4], 64
    $region29: #{tpu_custom_call.1} parent=1 // pred_fallthru
      _
    %270 = vsyncpa [#allocation3], 1
    %271 = vsyncpa [#allocation6], 1
    %272 = vsyncpa [#allocation4], 1

</llo_original>
